<compile_context>
chip_gen: v6e
topology: v6e:2x2x1
jax: 0.10.0
libtpu: 0.0.40
codegen_flags: <defaults>
</compile_context>

<pallas_src>
import functools

import jax
import jax.numpy as jnp
from jax import lax
from jax.experimental import pallas as pl
from jax.experimental.pallas import tpu as pltpu


def _lm_kernel(idx_ref, tok_ref, pos_ref, wqkv_ref, gamma_ref, beta_ref,
               wh_ref, bh_ref, out_ref, *, B, T, H, eps):
    """Single grid step: embedding -> attention -> LayerNorm -> head, all batches."""
    V, E = tok_ref.shape
    BT = B * T

    # --- embedding gather as a one-hot MXU matmul (keeps x off HBM) ---
    idx = idx_ref[...]                                           # (BT, 1) int32
    vocab_iota = lax.broadcasted_iota(jnp.int32, (BT, V), 1)
    onehot = (vocab_iota == idx).astype(jnp.float32)             # (BT, V)
    x = jnp.dot(onehot, tok_ref[...], preferred_element_type=jnp.float32)
    x = x + pos_ref[...]                                         # (BT, E)

    # --- fused QKV projection: one (BT,E) @ (E,3H) matmul ---
    qkv = jnp.dot(x, wqkv_ref[...], preferred_element_type=jnp.float32)  # (BT, 3H)
    q = qkv[:, 0 * H:1 * H].reshape(B, T, H)
    k = qkv[:, 1 * H:2 * H].reshape(B, T, H)
    v = qkv[:, 2 * H:3 * H].reshape(B, T, H)

    # --- causal attention scores; contract last dims directly (no k.T) ---
    scale = float(H) ** -0.5                                      # Python scalar
    wei = jnp.einsum("bth,bsh->bts", q, k,
                     preferred_element_type=jnp.float32) * scale  # (B, T, T)

    row = lax.broadcasted_iota(jnp.int32, (T, T), 0)
    col = lax.broadcasted_iota(jnp.int32, (T, T), 1)
    wei = jnp.where((row >= col)[None], wei, -1e30)               # large finite neg

    # --- numerically stable softmax ---
    m = jnp.max(wei, axis=-1, keepdims=True)
    e = jnp.exp(wei - m)
    p = e / jnp.sum(e, axis=-1, keepdims=True)

    probs = jnp.einsum("bts,bsh->bth", p, v,
                       preferred_element_type=jnp.float32)        # (B, T, H)
    pf = probs.reshape(BT, H)

    # --- LayerNorm over last dim (H == E by construction) ---
    mean = jnp.mean(pf, axis=-1, keepdims=True)
    var = jnp.mean((pf - mean) ** 2, axis=-1, keepdims=True)
    y = (pf - mean) * lax.rsqrt(var + eps)
    y = y * gamma_ref[...] + beta_ref[...]                        # (BT, E)

    # --- model head to the lane-padded vocab (Vpad multiple of 128) ---
    logits = jnp.dot(y, wh_ref[...], preferred_element_type=jnp.float32)
    out_ref[...] = logits + bh_ref[...]                           # (BT, Vpad)


def language_model_forward(idx, params, *, block_size):
    """Full forward pass (targets=None).  Everything except the final unpad /
    reshape runs inside one fused Pallas kernel."""
    tok_table = params["tok_table"].astype(jnp.float32)   # (V, E)
    pos_table = params["pos_table"].astype(jnp.float32)   # (T, E)
    wq, wk, wv = params["wq"], params["wk"], params["wv"]  # (E, H) each
    gamma = params["gamma"].astype(jnp.float32)            # (1, E)
    beta = params["beta"].astype(jnp.float32)               # (1, E)
    wh = params["wh"].astype(jnp.float32)                    # (E, V)
    bh = params["bh"].astype(jnp.float32)                    # (1, V)

    V, E = tok_table.shape
    H = wq.shape[1]
    assert H == E, ("LayerNorm(embed_size) is applied to the attention output "
                    "of size head_size==block_size, so block_size must equal "
                    "embed_size for this module to be runnable.")

    idx = idx[:, -block_size:]
    B, T = idx.shape

    # Fuse QKV weights so the kernel does a single projection matmul.
    wqkv = jnp.concatenate([wq, wk, wv], axis=1).astype(jnp.float32)      # (E, 3H)

    # Pad the vocab (lane) dim to a multiple of 128 -> unmasked vector stores.
    VP = max(128, ((V + 127) // 128) * 128)
    wh_p = jnp.pad(wh, ((0, 0), (0, VP - V)))                             # (E, VP)
    bh_p = jnp.pad(bh, ((0, 0), (0, VP - V)))                             # (1, VP)

    # Flatten batch*time; pre-tile the positional table across the batch.
    idx_flat = idx.reshape(B * T, 1).astype(jnp.int32)                    # (BT, 1)
    pos_flat = jnp.tile(pos_table, (B, 1))                                # (BT, E)

    kernel = functools.partial(_lm_kernel, B=B, T=T, H=H, eps=1e-5)

    def full(shape):
        zeros = (0,) * len(shape)
        return pl.BlockSpec(shape, lambda i: zeros)

    logits_p = pl.pallas_call(
        kernel,
        out_shape=jax.ShapeDtypeStruct((B * T, VP), jnp.float32),
        grid=(1,),
        in_specs=[
            full((B * T, 1)),     # idx
            full((V, E)),         # tok_table
            full((B * T, E)),     # pos (pre-tiled)
            full((E, 3 * H)),     # fused QKV weight
            full((1, E)),         # gamma
            full((1, E)),         # beta
            full((E, VP)),        # padded head weight
            full((1, VP)),        # padded head bias
        ],
        out_specs=full((B * T, VP)),
        compiler_params=pltpu.CompilerParams(
            dimension_semantics=("arbitrary",)),
    )(idx_flat, tok_table, pos_flat, wqkv, gamma, beta, wh_p, bh_p)

    logits = logits_p[:, :V].reshape(B, T, V)
    return logits, None


def _reference_forward(idx, params, *, block_size):
    """Pure-JAX reference mirroring the PyTorch forward (targets=None)."""
    idx = idx[:, -block_size:]
    x = params["tok_table"][idx] + params["pos_table"][jnp.arange(block_size)][None]
    q = x @ params["wq"]
    k = x @ params["wk"]
    v = x @ params["wv"]
    T = x.shape[1]
    wei = (q @ jnp.swapaxes(k, -2, -1)) * (k.shape[-1] ** -0.5)
    tril = jnp.tril(jnp.ones((T, T)))
    wei = jnp.where(tril == 0, -jnp.inf, wei)
    wei = jax.nn.softmax(wei, axis=-1)
    probs = wei @ v
    mean = probs.mean(-1, keepdims=True)
    var = ((probs - mean) ** 2).mean(-1, keepdims=True)
    y = (probs - mean) / jnp.sqrt(var + 1e-5)
    y = y * params["gamma"][0] + params["beta"][0]
    return y @ params["wh"] + params["bh"][0]


def init_params(key, vocab_size, embed_size, block_size):
    head_size = block_size  # per AttentionHead(embed_size, block_size, vocab_size)
    ks = jax.random.split(key, 7)
    lin = lambda k, fi, fo: jax.random.uniform(
        k, (fi, fo), jnp.float32, -1.0 / jnp.sqrt(fi), 1.0 / jnp.sqrt(fi))
    return {
        "tok_table": jax.random.normal(ks[0], (vocab_size, embed_size), jnp.float32),
        "pos_table": jax.random.normal(ks[1], (block_size, embed_size), jnp.float32),
        "wq": lin(ks[2], embed_size, head_size),
        "wk": lin(ks[3], embed_size, head_size),
        "wv": lin(ks[4], embed_size, head_size),
        "gamma": jnp.ones((1, embed_size), jnp.float32),
        "beta": jnp.zeros((1, embed_size), jnp.float32),
        "wh": lin(ks[5], embed_size, vocab_size),
        "bh": jax.random.uniform(ks[6], (1, vocab_size), jnp.float32,
                                 -1.0 / jnp.sqrt(embed_size),
                                 1.0 / jnp.sqrt(embed_size)),
    }


if __name__ == "__main__":
    # block_size must equal embed_size for the reference module to be runnable.
    vocab_size, embed_size, block_size, batch_size = 64, 16, 16, 2

    key = jax.random.PRNGKey(0)
    pkey, ikey = jax.random.split(key)
    params = init_params(pkey, vocab_size, embed_size, block_size)

    idx = jax.random.randint(ikey, (batch_size, block_size), 0, vocab_size,
                             dtype=jnp.int32)

    logits, loss = language_model_forward(idx, params, block_size=block_size)
    logits = jax.block_until_ready(logits)

    ref = _reference_forward(idx, params, block_size=block_size)
    assert logits.shape == (batch_size, block_size, vocab_size)
    assert loss is None
    assert jnp.allclose(logits, ref, atol=1e-4, rtol=1e-4), "mismatch vs reference"
    # TODO(synk): cross-entropy loss path (targets is not None) and generate()
    # (multinomial sampling loop) are not implemented as kernels.
    print("KERNEL_OK")
</pallas_src>

<mosaic_0001>
module attributes {stable_mosaic.version = 11 : i64} {
  func.func @_lm_kernel(%arg0: i32, %arg1: memref<32x1xi32, #tpu.memory_space<vmem>>, %arg2: memref<64x16xf32, #tpu.memory_space<vmem>>, %arg3: memref<32x16xf32, #tpu.memory_space<vmem>>, %arg4: memref<16x48xf32, #tpu.memory_space<vmem>>, %arg5: memref<1x16xf32, #tpu.memory_space<vmem>>, %arg6: memref<1x16xf32, #tpu.memory_space<vmem>>, %arg7: memref<16x128xf32, #tpu.memory_space<vmem>>, %arg8: memref<1x128xf32, #tpu.memory_space<vmem>>, %arg9: memref<32x128xf32, #tpu.memory_space<vmem>>) attributes {dimension_semantics = [#tpu.dimension_semantics<arbitrary>], iteration_bounds = array<i64: 1>, scalar_prefetch = 0 : i64, scratch_operands = 0 : i64, tpu.core_type = #tpu.core_type<tc>, window_params = [{pipeline_mode = #tpu.pipeline_mode<synchronous>, transform_indices = @transform_0, window_bounds = array<i64: 32, 1>}, {pipeline_mode = #tpu.pipeline_mode<synchronous>, transform_indices = @transform_1, window_bounds = array<i64: 64, 16>}, {pipeline_mode = #tpu.pipeline_mode<synchronous>, transform_indices = @transform_2, window_bounds = array<i64: 32, 16>}, {pipeline_mode = #tpu.pipeline_mode<synchronous>, transform_indices = @transform_3, window_bounds = array<i64: 16, 48>}, {pipeline_mode = #tpu.pipeline_mode<synchronous>, transform_indices = @transform_4, window_bounds = array<i64: 1, 16>}, {pipeline_mode = #tpu.pipeline_mode<synchronous>, transform_indices = @transform_5, window_bounds = array<i64: 1, 16>}, {pipeline_mode = #tpu.pipeline_mode<synchronous>, transform_indices = @transform_6, window_bounds = array<i64: 16, 128>}, {pipeline_mode = #tpu.pipeline_mode<synchronous>, transform_indices = @transform_7, window_bounds = array<i64: 1, 128>}, {pipeline_mode = #tpu.pipeline_mode<synchronous>, transform_indices = @transform_8, window_bounds = array<i64: 32, 128>}]} {
    %c0 = arith.constant 0 : index
    %c0_0 = arith.constant 0 : index
    %0 = vector.load %arg1[%c0, %c0_0] : memref<32x1xi32, #tpu.memory_space<vmem>>, vector<32x1xi32>
    %1 = tpu.iota {dimensions = array<i32: 1>} : vector<32x64xi32>
    %2 = vector.broadcast %0 : vector<32x1xi32> to vector<32x64xi32>
    %3 = arith.cmpi eq, %1, %2 : vector<32x64xi32>
    %4 = arith.extui %3 : vector<32x64xi1> to vector<32x64xi32>
    %5 = arith.sitofp %4 : vector<32x64xi32> to vector<32x64xf32>
    %c0_1 = arith.constant 0 : index
    %c0_2 = arith.constant 0 : index
    %6 = vector.load %arg2[%c0_1, %c0_2] : memref<64x16xf32, #tpu.memory_space<vmem>>, vector<64x16xf32>
    %cst = arith.constant dense<0.000000e+00> : vector<32x16xf32>
    %7 = tpu.matmul %5, %6, %cst {dimension_numbers = #tpu.dot_dimension_numbers<[1], [0], [0], [1], [0, 0, 1, 1], [], []>} : vector<32x64xf32>, vector<64x16xf32>, vector<32x16xf32> -> vector<32x16xf32>
    %c0_3 = arith.constant 0 : index
    %c0_4 = arith.constant 0 : index
    %8 = vector.load %arg3[%c0_3, %c0_4] : memref<32x16xf32, #tpu.memory_space<vmem>>, vector<32x16xf32>
    %9 = arith.addf %7, %8 : vector<32x16xf32>
    %c0_5 = arith.constant 0 : index
    %c0_6 = arith.constant 0 : index
    %10 = vector.load %arg4[%c0_5, %c0_6] : memref<16x48xf32, #tpu.memory_space<vmem>>, vector<16x48xf32>
    %cst_7 = arith.constant dense<0.000000e+00> : vector<32x48xf32>
    %11 = tpu.matmul %9, %10, %cst_7 {dimension_numbers = #tpu.dot_dimension_numbers<[1], [0], [0], [1], [0, 0, 1, 1], [], []>} : vector<32x16xf32>, vector<16x48xf32>, vector<32x48xf32> -> vector<32x48xf32>
    %12 = vector.extract_strided_slice %11 {offsets = [0, 0], sizes = [32, 16], strides = [1, 1]} : vector<32x48xf32> to vector<32x16xf32>
    %13 = vector.shape_cast %12 : vector<32x16xf32> to vector<2x16x16xf32>
    %14 = vector.extract_strided_slice %11 {offsets = [0, 16], sizes = [32, 16], strides = [1, 1]} : vector<32x48xf32> to vector<32x16xf32>
    %15 = vector.shape_cast %14 : vector<32x16xf32> to vector<2x16x16xf32>
    %16 = vector.extract_strided_slice %11 {offsets = [0, 32], sizes = [32, 16], strides = [1, 1]} : vector<32x48xf32> to vector<32x16xf32>
    %17 = vector.shape_cast %16 : vector<32x16xf32> to vector<2x16x16xf32>
    "tpu.trace_start"() <{level = 10 : i32, message = "bth,bsh->bts"}> : () -> ()
    %cst_8 = arith.constant dense<0.000000e+00> : vector<2x16x16xf32>
    %18 = tpu.matmul %13, %15, %cst_8 {dimension_numbers = #tpu.dot_dimension_numbers<[2], [2], [1], [1], [0, 0, 0, 1, 1, 1], [0], [0]>} : vector<2x16x16xf32>, vector<2x16x16xf32>, vector<2x16x16xf32> -> vector<2x16x16xf32>
    "tpu.trace_stop"() : () -> ()
    %cst_9 = arith.constant 2.500000e-01 : f32
    %19 = vector.broadcast %cst_9 : f32 to vector<2x16x16xf32>
    %20 = arith.mulf %18, %19 : vector<2x16x16xf32>
    %21 = tpu.iota {dimensions = array<i32: 0>} : vector<16x16xi32>
    %22 = tpu.iota {dimensions = array<i32: 1>} : vector<16x16xi32>
    %23 = arith.cmpi sge, %21, %22 : vector<16x16xi32>
    %24 = vector.shape_cast %23 : vector<16x16xi1> to vector<1x16x16xi1>
    %cst_10 = arith.constant -1.000000e+30 : f32
    %25 = vector.shape_cast %24 : vector<1x16x16xi1> to vector<1x16x16xi1>
    %26 = vector.broadcast %25 : vector<1x16x16xi1> to vector<2x16x16xi1>
    %27 = vector.broadcast %cst_10 : f32 to vector<2x16x16xf32>
    %28 = arith.select %26, %20, %27 : vector<2x16x16xi1>, vector<2x16x16xf32>
    %cst_11 = arith.constant dense<0xFF800000> : vector<2x16xf32>
    %29 = vector.multi_reduction <maximumf>, %28, %cst_11 [2] : vector<2x16x16xf32> to vector<2x16xf32>
    %30 = vector.shape_cast %29 : vector<2x16xf32> to vector<2x16x1xf32>
    %31 = vector.broadcast %30 : vector<2x16x1xf32> to vector<2x16x16xf32>
    %32 = arith.subf %28, %31 : vector<2x16x16xf32>
    %33 = math.exp %32 : vector<2x16x16xf32>
    %cst_12 = arith.constant dense<0.000000e+00> : vector<2x16xf32>
    %34 = vector.multi_reduction <add>, %33, %cst_12 [2] : vector<2x16x16xf32> to vector<2x16xf32>
    %35 = vector.shape_cast %34 : vector<2x16xf32> to vector<2x16x1xf32>
    %36 = vector.broadcast %35 : vector<2x16x1xf32> to vector<2x16x16xf32>
    %37 = arith.divf %33, %36 : vector<2x16x16xf32>
    "tpu.trace_start"() <{level = 10 : i32, message = "bts,bsh->bth"}> : () -> ()
    %cst_13 = arith.constant dense<0.000000e+00> : vector<2x16x16xf32>
    %38 = tpu.matmul %37, %17, %cst_13 {dimension_numbers = #tpu.dot_dimension_numbers<[2], [1], [1], [2], [0, 0, 0, 1, 1, 2], [0], [0]>} : vector<2x16x16xf32>, vector<2x16x16xf32>, vector<2x16x16xf32> -> vector<2x16x16xf32>
    "tpu.trace_stop"() : () -> ()
    %39 = vector.shape_cast %38 : vector<2x16x16xf32> to vector<32x16xf32>
    %cst_14 = arith.constant dense<0.000000e+00> : vector<32xf32>
    %40 = vector.multi_reduction <add>, %39, %cst_14 [1] : vector<32x16xf32> to vector<32xf32>
    %41 = vector.shape_cast %40 : vector<32xf32> to vector<32x1xf32>
    %cst_15 = arith.constant 1.600000e+01 : f32
    %42 = vector.broadcast %cst_15 : f32 to vector<32x1xf32>
    %43 = arith.divf %41, %42 : vector<32x1xf32>
    %44 = vector.broadcast %43 : vector<32x1xf32> to vector<32x16xf32>
    %45 = arith.subf %39, %44 : vector<32x16xf32>
    %46 = arith.mulf %45, %45 : vector<32x16xf32>
    %cst_16 = arith.constant dense<0.000000e+00> : vector<32xf32>
    %47 = vector.multi_reduction <add>, %46, %cst_16 [1] : vector<32x16xf32> to vector<32xf32>
    %48 = vector.shape_cast %47 : vector<32xf32> to vector<32x1xf32>
    %cst_17 = arith.constant 1.600000e+01 : f32
    %49 = vector.broadcast %cst_17 : f32 to vector<32x1xf32>
    %50 = arith.divf %48, %49 : vector<32x1xf32>
    %51 = vector.broadcast %43 : vector<32x1xf32> to vector<32x16xf32>
    %52 = arith.subf %39, %51 : vector<32x16xf32>
    %cst_18 = arith.constant 9.99999974E-6 : f32
    %53 = vector.broadcast %cst_18 : f32 to vector<32x1xf32>
    %54 = arith.addf %50, %53 : vector<32x1xf32>
    %55 = math.rsqrt %54 : vector<32x1xf32>
    %56 = vector.broadcast %55 : vector<32x1xf32> to vector<32x16xf32>
    %57 = arith.mulf %52, %56 : vector<32x16xf32>
    %c0_19 = arith.constant 0 : index
    %c0_20 = arith.constant 0 : index
    %58 = vector.load %arg5[%c0_19, %c0_20] : memref<1x16xf32, #tpu.memory_space<vmem>>, vector<1x16xf32>
    %59 = vector.broadcast %58 : vector<1x16xf32> to vector<32x16xf32>
    %60 = arith.mulf %57, %59 : vector<32x16xf32>
    %c0_21 = arith.constant 0 : index
    %c0_22 = arith.constant 0 : index
    %61 = vector.load %arg6[%c0_21, %c0_22] : memref<1x16xf32, #tpu.memory_space<vmem>>, vector<1x16xf32>
    %62 = vector.broadcast %61 : vector<1x16xf32> to vector<32x16xf32>
    %63 = arith.addf %60, %62 : vector<32x16xf32>
    %c0_23 = arith.constant 0 : index
    %c0_24 = arith.constant 0 : index
    %64 = vector.load %arg7[%c0_23, %c0_24] : memref<16x128xf32, #tpu.memory_space<vmem>>, vector<16x128xf32>
    %cst_25 = arith.constant dense<0.000000e+00> : vector<32x128xf32>
    %65 = tpu.matmul %63, %64, %cst_25 {dimension_numbers = #tpu.dot_dimension_numbers<[1], [0], [0], [1], [0, 0, 1, 1], [], []>} : vector<32x16xf32>, vector<16x128xf32>, vector<32x128xf32> -> vector<32x128xf32>
    %c0_26 = arith.constant 0 : index
    %c0_27 = arith.constant 0 : index
    %66 = vector.load %arg8[%c0_26, %c0_27] : memref<1x128xf32, #tpu.memory_space<vmem>>, vector<1x128xf32>
    %67 = vector.broadcast %66 : vector<1x128xf32> to vector<32x128xf32>
    %68 = arith.addf %65, %67 : vector<32x128xf32>
    %c0_28 = arith.constant 0 : index
    %c0_29 = arith.constant 0 : index
    %69 = vector.load %arg9[%c0_28, %c0_29] : memref<32x128xf32, #tpu.memory_space<vmem>>, vector<32x128xf32>
    tpu.vector_store %arg9[%c0_28, %c0_29], %68 {strides = array<i32>} : memref<32x128xf32, #tpu.memory_space<vmem>>, vector<32x128xf32>,
    return
  }
  func.func @transform_0(%arg0: i32) -> (i32, i32) {
    %c0_i32 = arith.constant 0 : i32
    %c0_i32_0 = arith.constant 0 : i32
    %c0_i32_1 = arith.constant 0 : i32
    return %c0_i32, %c0_i32_0 : i32, i32
  }
  func.func @transform_1(%arg0: i32) -> (i32, i32) {
    %c0_i32 = arith.constant 0 : i32
    %c0_i32_0 = arith.constant 0 : i32
    %c0_i32_1 = arith.constant 0 : i32
    return %c0_i32, %c0_i32_0 : i32, i32
  }
  func.func @transform_2(%arg0: i32) -> (i32, i32) {
    %c0_i32 = arith.constant 0 : i32
    %c0_i32_0 = arith.constant 0 : i32
    %c0_i32_1 = arith.constant 0 : i32
    return %c0_i32, %c0_i32_0 : i32, i32
  }
  func.func @transform_3(%arg0: i32) -> (i32, i32) {
    %c0_i32 = arith.constant 0 : i32
    %c0_i32_0 = arith.constant 0 : i32
    %c0_i32_1 = arith.constant 0 : i32
    return %c0_i32, %c0_i32_0 : i32, i32
  }
  func.func @transform_4(%arg0: i32) -> (i32, i32) {
    %c0_i32 = arith.constant 0 : i32
    %c0_i32_0 = arith.constant 0 : i32
    %c0_i32_1 = arith.constant 0 : i32
    return %c0_i32, %c0_i32_0 : i32, i32
  }
  func.func @transform_5(%arg0: i32) -> (i32, i32) {
    %c0_i32 = arith.constant 0 : i32
    %c0_i32_0 = arith.constant 0 : i32
    %c0_i32_1 = arith.constant 0 : i32
    return %c0_i32, %c0_i32_0 : i32, i32
  }
  func.func @transform_6(%arg0: i32) -> (i32, i32) {
    %c0_i32 = arith.constant 0 : i32
    %c0_i32_0 = arith.constant 0 : i32
    %c0_i32_1 = arith.constant 0 : i32
    return %c0_i32, %c0_i32_0 : i32, i32
  }
  func.func @transform_7(%arg0: i32) -> (i32, i32) {
    %c0_i32 = arith.constant 0 : i32
    %c0_i32_0 = arith.constant 0 : i32
    %c0_i32_1 = arith.constant 0 : i32
    return %c0_i32, %c0_i32_0 : i32, i32
  }
  func.func @transform_8(%arg0: i32) -> (i32, i32) {
    %c0_i32 = arith.constant 0 : i32
    %c0_i32_0 = arith.constant 0 : i32
    %c0_i32_1 = arith.constant 0 : i32
    return %c0_i32, %c0_i32_0 : i32, i32
  }
}

</mosaic_0001>

<llo_original>
// kernel: tpu_custom_call.1
$region0: #{tpu_custom_call.1}
  #allocation0 [shape = 'u32[]', space=smem, size = 0x4, offset = 0x4, fixed_abs, tag = 'smem constant byte address 0x4 - core index']
  #allocation1 [shape = 'u32[144,128]{1,0:T(1,128)}', space=vmem, size = 0x12000, scoped, tag = 'internal scratch']
  %s0 = inlined_call_operand.vmem [shape: s32[32,1], index: 0, kind: input, shape index: {}]
  %s1 = inlined_call_operand.vmem [shape: f32[64,16], index: 1, kind: input, shape index: {}]
  %s2 = inlined_call_operand.vmem [shape: f32[32,16], index: 2, kind: input, shape index: {}]
  %s3 = inlined_call_operand.vmem [shape: f32[16,48], index: 3, kind: input, shape index: {}]
  %s4 = inlined_call_operand.vmem [shape: f32[1,16], index: 4, kind: input, shape index: {}]
  %s5 = inlined_call_operand.vmem [shape: f32[1,16], index: 5, kind: input, shape index: {}]
  %s6 = inlined_call_operand.vmem [shape: f32[16,128], index: 6, kind: input, shape index: {}]
  %s7 = inlined_call_operand.vmem [shape: f32[1,128], index: 7, kind: input, shape index: {}]
  %s8 = inlined_call_operand.hbm [shape: f32[32,128], index: 8, kind: output, shape index: {}]
  %s9 = sld [smem:[#allocation0]]
  $region42: #{tpu_custom_call.1} parent=0
    _
  %s11 = ssub.s32 1, %s9
  %s12 = scalar_select 0, %s11, %s9
  $region1: #{tpu_custom_call.1} parent=0
    #allocation2 [shape = 'u8[16384]{0}', space=vmem, size = 0x4000, scoped, tag = 'output window, operand 0, single buffered']
    #allocation3 [shape = 's32[1]{0}', space=sflag, size = 0x4, scoped, tag = 'scoped memory for tpu_custom_call.1']
    %13 = vsyncpa [#allocation3], 0
    // Predicated region
    $region2: #{tpu_custom_call.1} parent=1 // pred_check
      _
    $region3: #{tpu_custom_call.1} parent=1 // pred_check_branch
      %15 = sbr.rel (0) target = $region5
    $region4: #{tpu_custom_call.1} parent=1 // pred_region
      _
    $region5: #{tpu_custom_call.1} parent=1 // pred_fallthru
      _
    // Predicated region
    $region6: #{tpu_custom_call.1} parent=1 // pred_check
      _
    $region7: #{tpu_custom_call.1} parent=1 // pred_check_branch
      %17 = sbr.rel (0) target = $region9
    $region8: #{tpu_custom_call.1} parent=1 // pred_region
      _
    $region9: #{tpu_custom_call.1} parent=1 // pred_fallthru
      _
    // Predicated region
    $region10: #{tpu_custom_call.1} parent=1 // pred_check
      _
    $region11: #{tpu_custom_call.1} parent=1 // pred_check_branch
      %19 = sbr.rel (0) target = $region13
    $region12: #{tpu_custom_call.1} parent=1 // pred_region
      _
    $region13: #{tpu_custom_call.1} parent=1 // pred_fallthru
      _
    // Predicated region
    $region14: #{tpu_custom_call.1} parent=1 // pred_check
      _
    $region15: #{tpu_custom_call.1} parent=1 // pred_check_branch
      %21 = sbr.rel (0) target = $region17
    $region16: #{tpu_custom_call.1} parent=1 // pred_region
      _
    $region17: #{tpu_custom_call.1} parent=1 // pred_fallthru
      _
    // Predicated region
    $region18: #{tpu_custom_call.1} parent=1 // pred_check
      _
    $region19: #{tpu_custom_call.1} parent=1 // pred_check_branch
      %23 = sbr.rel (0) target = $region21
    $region20: #{tpu_custom_call.1} parent=1 // pred_region
      _
    $region21: #{tpu_custom_call.1} parent=1 // pred_fallthru
      _
    // Predicated region
    $region22: #{tpu_custom_call.1} parent=1 // pred_check
      _
    $region23: #{tpu_custom_call.1} parent=1 // pred_check_branch
      %25 = sbr.rel (0) target = $region25
    $region24: #{tpu_custom_call.1} parent=1 // pred_region
      _
    $region25: #{tpu_custom_call.1} parent=1 // pred_fallthru
      _
    // Predicated region
    $region26: #{tpu_custom_call.1} parent=1 // pred_check
      _
    $region27: #{tpu_custom_call.1} parent=1 // pred_check_branch
      %27 = sbr.rel (0) target = $region29
    $region28: #{tpu_custom_call.1} parent=1 // pred_region
      _
    $region29: #{tpu_custom_call.1} parent=1 // pred_fallthru
      _
    // Predicated region
    $region30: #{tpu_custom_call.1} parent=1 // pred_check
      _
    $region31: #{tpu_custom_call.1} parent=1 // pred_check_branch
      %29 = sbr.rel (0) target = $region33
    $region32: #{tpu_custom_call.1} parent=1 // pred_region
      _
    $region33: #{tpu_custom_call.1} parent=1 // pred_fallthru
      _
    %v30 = vld [vmem:[%s0] sm:$0xff]
    %v31 = vld [vmem:[%s0 + $0x8] sm:$0xff]
    %v32 = vld [vmem:[%s0 + $0x10] sm:$0xff]
    %v33 = vld [vmem:[%s0 + $0x18] sm:$0xff]
    %v34 = vlaneseq
    %v35 = vand.u32 %v34, 127
    %36 = vset.pattern.permute.xlu0 0
    %37 = vperm.xlu0 %36, %v30
    %v38 = vpop.permute.xlu0 %37
    %39 = vset.pattern.permute.xlu0 0
    %40 = vperm.xlu0 %39, %v31
    %v41 = vpop.permute.xlu0 %40
    %42 = vset.pattern.permute.xlu0 0
    %43 = vperm.xlu0 %42, %v32
    %v44 = vpop.permute.xlu0 %43
    %45 = vset.pattern.permute.xlu0 0
    %46 = vperm.xlu0 %45, %v33
    %v47 = vpop.permute.xlu0 %46
    %vm48 = vcmp.eq.s32.totalorder %v35, %v38
    %vm49 = vcmp.eq.s32.totalorder %v35, %v41
    %vm50 = vcmp.eq.s32.totalorder %v35, %v44
    %vm51 = vcmp.eq.s32.totalorder %v35, %v47
    %v52 = vsel %vm48, 1, 0
    %v53 = vsel %vm49, 1, 0
    %v54 = vsel %vm50, 1, 0
    %v55 = vsel %vm51, 1, 0
    %v56 = vcvt.s32.f32 %v52
    %v57 = vcvt.s32.f32 %v53
    %v58 = vcvt.s32.f32 %v54
    %v59 = vcvt.s32.f32 %v55
    %v60 = vld [vmem:[%s1] sm:$0xff]
    %v61 = vld [vmem:[%s1 + $0x8] sm:$0xff]
    %v62 = vld [vmem:[%s1 + $0x10] sm:$0xff]
    %v63 = vld [vmem:[%s1 + $0x18] sm:$0xff]
    %v64 = vld [vmem:[%s1 + $0x20] sm:$0xff]
    %v65 = vld [vmem:[%s1 + $0x28] sm:$0xff]
    %v66 = vld [vmem:[%s1 + $0x30] sm:$0xff]
    %v67 = vld [vmem:[%s1 + $0x38] sm:$0xff]
    %v68 = vld [vmem:[%s2] sm:$0xff]
    %v69 = vld [vmem:[%s2 + $0x8] sm:$0xff]
    %v70 = vld [vmem:[%s2 + $0x10] sm:$0xff]
    %v71 = vld [vmem:[%s2 + $0x18] sm:$0xff]
    %vm72 = vcmask 523264
    %v74 = vsel %vm72, %v56, 0
    %v77 = vsel %vm72, %v57, 0
    %v80 = vsel %vm72, %v58, 0
    %v83 = vsel %vm72, %v59, 0
    %85 = vmatprep.subr.mxu0 0.0
    %86 = vmatpush1.msra.mxu0 0.0
    %87 = vmatprep.subr.mxu0 0.0
    %88 = vmatpush1.msra.mxu0 0.0
    %89 = vmatprep.subr.mxu0 0.0
    %90 = vmatpush1.msra.mxu0 0.0
    %91 = vmatprep.subr.mxu0 0.0
    %92 = vmatpush1.msra.mxu0 0.0
    %93 = vmatprep.subr.mxu0 0.0
    %94 = vmatpush1.msra.mxu0 0.0
    %95 = vmatprep.subr.mxu0 0.0
    %96 = vmatpush1.msra.mxu0 0.0
    %97 = vmatprep.subr.mxu0 0.0
    %98 = vmatpush1.msra.mxu0 0.0
    %99 = vmatprep.subr.mxu0 0.0
    %100 = vmatpush1.msra.mxu0 0.0
    %101 = vmatprep.subr.mxu0 0.0
    %102 = vmatpush1.msra.mxu0 %v67
    %103 = vmatprep.subr.mxu0 0.0
    %104 = vmatpush1.msra.mxu0 %v66
    %105 = vmatprep.subr.mxu0 0.0
    %106 = vmatpush1.msra.mxu0 %v65
    %107 = vmatprep.subr.mxu0 0.0
    %108 = vmatpush1.msra.mxu0 %v64
    %109 = vmatprep.subr.mxu0 0.0
    %110 = vmatpush1.msra.mxu0 %v63
    %111 = vmatprep.subr.mxu0 0.0
    %112 = vmatpush1.msra.mxu0 %v62
    %113 = vmatprep.subr.mxu0 0.0
    %114 = vmatpush1.msra.mxu0 %v61
    %115 = vmatprep.subr.mxu0 0.0
    %116 = vmatpush1.msra.mxu0 %v60
    %117 = vmatprep.subr.mxu0 0.0
    %118 = vmatpush2.msra.mxu0 0.0
    %119 = vmatprep.subr.mxu0 0.0
    %120 = vmatpush2.msra.mxu0 0.0
    %121 = vmatprep.subr.mxu0 0.0
    %122 = vmatpush2.msra.mxu0 0.0
    %123 = vmatprep.subr.mxu0 0.0
    %124 = vmatpush2.msra.mxu0 0.0
    %125 = vmatprep.subr.mxu0 0.0
    %126 = vmatpush2.msra.mxu0 0.0
    %127 = vmatprep.subr.mxu0 0.0
    %128 = vmatpush2.msra.mxu0 0.0
    %129 = vmatprep.subr.mxu0 0.0
    %130 = vmatpush2.msra.mxu0 0.0
    %131 = vmatprep.subr.mxu0 0.0
    %132 = vmatpush2.msra.mxu0 0.0
    %133 = vmatprep.subr.mxu0 0.0
    %134 = vmatpush2.msra.mxu0 0.0
    %135 = vmatprep.subr.mxu0 0.0
    %136 = vmatpush2.msra.mxu0 0.0
    %137 = vmatprep.subr.mxu0 0.0
    %138 = vmatpush2.msra.mxu0 0.0
    %139 = vmatprep.subr.mxu0 0.0
    %140 = vmatpush2.msra.mxu0 0.0
    %141 = vmatprep.subr.mxu0 0.0
    %142 = vmatpush2.msra.mxu0 0.0
    %143 = vmatprep.subr.mxu0 0.0
    %144 = vmatpush2.msra.mxu0 0.0
    %145 = vmatprep.subr.mxu0 0.0
    %146 = vmatpush2.msra.mxu0 0.0
    %147 = vmatprep.subr.mxu0 0.0
    %148 = vmatpush2.msra.mxu0 0.0
    %149 = vmatprep.mubr.f32.mxu0 0.0
    %150 = vmatmul.mubr.f32.gmra.mxu0 %v74
    %v151 = vpop.f32.mrf.mxu0
    %v152 = vadd.f32 %v68, %v151
    %v153 = vpop.f32.mrf.mxu0
    %154 = vmatprep.mubr.f32.mxu0 0.0
    %155 = vmatmul.mubr.f32.gmra.mxu0 %v77
    %v156 = vpop.f32.mrf.mxu0
    %v157 = vadd.f32 %v69, %v156
    %v158 = vpop.f32.mrf.mxu0
    %159 = vmatprep.mubr.f32.mxu0 0.0
    %160 = vmatmul.mubr.f32.gmra.mxu0 %v80
    %v161 = vpop.f32.mrf.mxu0
    %v162 = vadd.f32 %v70, %v161
    %v163 = vpop.f32.mrf.mxu0
    %164 = vmatprep.mubr.f32.mxu0 0.0
    %165 = vmatmul.mubr.f32.gmra.mxu0 %v83
    %v166 = vpop.f32.mrf.mxu0
    %v167 = vadd.f32 %v71, %v166
    %v168 = vpop.f32.mrf.mxu0
    %169 = vdwg.mxu0
    %v170 = vld [vmem:[%s3] sm:$0xff]
    %v171 = vld [vmem:[%s3 + $0x8] sm:$0xff]
    %vm172 = vcmask 130048
    %v174 = vsel %vm172, %v152, 0
    %v177 = vsel %vm172, %v157, 0
    %v180 = vsel %vm172, %v162, 0
    %v183 = vsel %vm172, %v167, 0
    %185 = vmatprep.subr.mxu0 0.0
    %186 = vmatpush1.msra.mxu0 0.0
    %187 = vmatprep.subr.mxu0 0.0
    %188 = vmatpush1.msra.mxu0 0.0
    %189 = vmatprep.subr.mxu0 0.0
    %190 = vmatpush1.msra.mxu0 0.0
    %191 = vmatprep.subr.mxu0 0.0
    %192 = vmatpush1.msra.mxu0 0.0
    %193 = vmatprep.subr.mxu0 0.0
    %194 = vmatpush1.msra.mxu0 0.0
    %195 = vmatprep.subr.mxu0 0.0
    %196 = vmatpush1.msra.mxu0 0.0
    %197 = vmatprep.subr.mxu0 0.0
    %198 = vmatpush1.msra.mxu0 0.0
    %199 = vmatprep.subr.mxu0 0.0
    %200 = vmatpush1.msra.mxu0 0.0
    %201 = vmatprep.subr.mxu0 0.0
    %202 = vmatpush1.msra.mxu0 0.0
    %203 = vmatprep.subr.mxu0 0.0
    %204 = vmatpush1.msra.mxu0 0.0
    %205 = vmatprep.subr.mxu0 0.0
    %206 = vmatpush1.msra.mxu0 0.0
    %207 = vmatprep.subr.mxu0 0.0
    %208 = vmatpush1.msra.mxu0 0.0
    %209 = vmatprep.subr.mxu0 0.0
    %210 = vmatpush1.msra.mxu0 0.0
    %211 = vmatprep.subr.mxu0 0.0
    %212 = vmatpush1.msra.mxu0 0.0
    %213 = vmatprep.subr.mxu0 0.0
    %214 = vmatpush1.msra.mxu0 %v171
    %215 = vmatprep.subr.mxu0 0.0
    %216 = vmatpush1.msra.mxu0 %v170
    %217 = vmatprep.subr.mxu0 0.0
    %218 = vmatpush2.msra.mxu0 0.0
    %219 = vmatprep.subr.mxu0 0.0
    %220 = vmatpush2.msra.mxu0 0.0
    %221 = vmatprep.subr.mxu0 0.0
    %222 = vmatpush2.msra.mxu0 0.0
    %223 = vmatprep.subr.mxu0 0.0
    %224 = vmatpush2.msra.mxu0 0.0
    %225 = vmatprep.subr.mxu0 0.0
    %226 = vmatpush2.msra.mxu0 0.0
    %227 = vmatprep.subr.mxu0 0.0
    %228 = vmatpush2.msra.mxu0 0.0
    %229 = vmatprep.subr.mxu0 0.0
    %230 = vmatpush2.msra.mxu0 0.0
    %231 = vmatprep.subr.mxu0 0.0
    %232 = vmatpush2.msra.mxu0 0.0
    %233 = vmatprep.subr.mxu0 0.0
    %234 = vmatpush2.msra.mxu0 0.0
    %235 = vmatprep.subr.mxu0 0.0
    %236 = vmatpush2.msra.mxu0 0.0
    %237 = vmatprep.subr.mxu0 0.0
    %238 = vmatpush2.msra.mxu0 0.0
    %239 = vmatprep.subr.mxu0 0.0
    %240 = vmatpush2.msra.mxu0 0.0
    %241 = vmatprep.subr.mxu0 0.0
    %242 = vmatpush2.msra.mxu0 0.0
    %243 = vmatprep.subr.mxu0 0.0
    %244 = vmatpush2.msra.mxu0 0.0
    %245 = vmatprep.subr.mxu0 0.0
    %246 = vmatpush2.msra.mxu0 0.0
    %247 = vmatprep.subr.mxu0 0.0
    %248 = vmatpush2.msra.mxu0 0.0
    %249 = vmatprep.mubr.f32.mxu0 0.0
    %250 = vmatmul.mubr.f32.gmra.mxu0 %v174
    %v251 = vpop.f32.mrf.mxu0
    %v252 = vadd.f32 0.0, %v251
    %v253 = vpop.f32.mrf.mxu0
    %254 = vmatprep.mubr.f32.mxu0 0.0
    %255 = vmatmul.mubr.f32.gmra.mxu0 %v177
    %v256 = vpop.f32.mrf.mxu0
    %v257 = vadd.f32 0.0, %v256
    %v258 = vpop.f32.mrf.mxu0
    %259 = vmatprep.mubr.f32.mxu0 0.0
    %260 = vmatmul.mubr.f32.gmra.mxu0 %v180
    %v261 = vpop.f32.mrf.mxu0
    %v262 = vadd.f32 0.0, %v261
    %v263 = vpop.f32.mrf.mxu0
    %264 = vmatprep.mubr.f32.mxu0 0.0
    %265 = vmatmul.mubr.f32.gmra.mxu0 %v183
    %v266 = vpop.f32.mrf.mxu0
    %v267 = vadd.f32 0.0, %v266
    %v268 = vpop.f32.mrf.mxu0
    %269 = vdwg.mxu0
    %272 = vrot.lane.b32.xlu0 %v252, 112
    %v273 = vpop.permute.xlu0 %272
    %274 = vrot.lane.b32.xlu0 %v257, 112
    %v275 = vpop.permute.xlu0 %274
    %v276 = vsel %vm172, %v252, 0
    %v278 = vsel %vm172, %v257, 0
    %v280 = vsel %vm172, %v273, 0
    %v282 = vsel %vm172, %v275, 0
    %284 = vmatprep.subr.mxu0 0.0
    %285 = vmatpush1.xpose.msra.mxu0 0.0
    %286 = vmatprep.subr.mxu0 0.0
    %287 = vmatpush1.xpose.msra.mxu0 0.0
    %288 = vmatprep.subr.mxu0 0.0
    %289 = vmatpush1.xpose.msra.mxu0 0.0
    %290 = vmatprep.subr.mxu0 0.0
    %291 = vmatpush1.xpose.msra.mxu0 0.0
    %292 = vmatprep.subr.mxu0 0.0
    %293 = vmatpush1.xpose.msra.mxu0 0.0
    %294 = vmatprep.subr.mxu0 0.0
    %295 = vmatpush1.xpose.msra.mxu0 0.0
    %296 = vmatprep.subr.mxu0 0.0
    %297 = vmatpush1.xpose.msra.mxu0 0.0
    %298 = vmatprep.subr.mxu0 0.0
    %299 = vmatpush1.xpose.msra.mxu0 0.0
    %300 = vmatprep.subr.mxu0 0.0
    %301 = vmatpush1.xpose.msra.mxu0 0.0
    %302 = vmatprep.subr.mxu0 0.0
    %303 = vmatpush1.xpose.msra.mxu0 0.0
    %304 = vmatprep.subr.mxu0 0.0
    %305 = vmatpush1.xpose.msra.mxu0 0.0
    %306 = vmatprep.subr.mxu0 0.0
    %307 = vmatpush1.xpose.msra.mxu0 0.0
    %308 = vmatprep.subr.mxu0 0.0
    %309 = vmatpush1.xpose.msra.mxu0 0.0
    %310 = vmatprep.subr.mxu0 0.0
    %311 = vmatpush1.xpose.msra.mxu0 0.0
    %312 = vmatprep.subr.mxu0 0.0
    %313 = vmatpush1.xpose.msra.mxu0 %v282
    %314 = vmatprep.subr.mxu0 0.0
    %315 = vmatpush1.xpose.msra.mxu0 %v280
    %316 = vmatprep.subr.mxu0 0.0
    %317 = vmatpush2.xpose.msra.mxu0 0.0
    %318 = vmatprep.subr.mxu0 0.0
    %319 = vmatpush2.xpose.msra.mxu0 0.0
    %320 = vmatprep.subr.mxu0 0.0
    %321 = vmatpush2.xpose.msra.mxu0 0.0
    %322 = vmatprep.subr.mxu0 0.0
    %323 = vmatpush2.xpose.msra.mxu0 0.0
    %324 = vmatprep.subr.mxu0 0.0
    %325 = vmatpush2.xpose.msra.mxu0 0.0
    %326 = vmatprep.subr.mxu0 0.0
    %327 = vmatpush2.xpose.msra.mxu0 0.0
    %328 = vmatprep.subr.mxu0 0.0
    %329 = vmatpush2.xpose.msra.mxu0 0.0
    %330 = vmatprep.subr.mxu0 0.0
    %331 = vmatpush2.xpose.msra.mxu0 0.0
    %332 = vmatprep.subr.mxu0 0.0
    %333 = vmatpush2.xpose.msra.mxu0 0.0
    %334 = vmatprep.subr.mxu0 0.0
    %335 = vmatpush2.xpose.msra.mxu0 0.0
    %336 = vmatprep.subr.mxu0 0.0
    %337 = vmatpush2.xpose.msra.mxu0 0.0
    %338 = vmatprep.subr.mxu0 0.0
    %339 = vmatpush2.xpose.msra.mxu0 0.0
    %340 = vmatprep.subr.mxu0 0.0
    %341 = vmatpush2.xpose.msra.mxu0 0.0
    %342 = vmatprep.subr.mxu0 0.0
    %343 = vmatpush2.xpose.msra.mxu0 0.0
    %344 = vmatprep.subr.mxu0 0.0
    %345 = vmatpush2.xpose.msra.mxu0 0.0
    %346 = vmatprep.subr.mxu0 0.0
    %347 = vmatpush2.xpose.msra.mxu0 0.0
    %348 = vmatprep.mubr.f32.mxu0 0.0
    %349 = vmatmul.mubr.f32.gmra.mxu0 %v276
    %v350 = vpop.f32.mrf.mxu0
    %v351 = vadd.f32 0.0, %v350
    %v352 = vpop.f32.mrf.mxu0
    %353 = vmatprep.mubr.f32.mxu0 0.0
    %354 = vmatmul.mubr.f32.gmra.mxu0 %v278
    %v355 = vpop.f32.mrf.mxu0
    %v356 = vadd.f32 0.0, %v355
    %v357 = vpop.f32.mrf.mxu0
    %358 = vdwg.mxu0
    %361 = vrot.lane.b32.xlu0 %v262, 112
    %v362 = vpop.permute.xlu0 %361
    %363 = vrot.lane.b32.xlu0 %v267, 112
    %v364 = vpop.permute.xlu0 %363
    %v365 = vsel %vm172, %v262, 0
    %v367 = vsel %vm172, %v267, 0
    %v369 = vsel %vm172, %v362, 0
    %v371 = vsel %vm172, %v364, 0
    %373 = vmatprep.subr.mxu0 0.0
    %374 = vmatpush1.xpose.msra.mxu0 0.0
    %375 = vmatprep.subr.mxu0 0.0
    %376 = vmatpush1.xpose.msra.mxu0 0.0
    %377 = vmatprep.subr.mxu0 0.0
    %378 = vmatpush1.xpose.msra.mxu0 0.0
    %379 = vmatprep.subr.mxu0 0.0
    %380 = vmatpush1.xpose.msra.mxu0 0.0
    %381 = vmatprep.subr.mxu0 0.0
    %382 = vmatpush1.xpose.msra.mxu0 0.0
    %383 = vmatprep.subr.mxu0 0.0
    %384 = vmatpush1.xpose.msra.mxu0 0.0
    %385 = vmatprep.subr.mxu0 0.0
    %386 = vmatpush1.xpose.msra.mxu0 0.0
    %387 = vmatprep.subr.mxu0 0.0
    %388 = vmatpush1.xpose.msra.mxu0 0.0
    %389 = vmatprep.subr.mxu0 0.0
    %390 = vmatpush1.xpose.msra.mxu0 0.0
    %391 = vmatprep.subr.mxu0 0.0
    %392 = vmatpush1.xpose.msra.mxu0 0.0
    %393 = vmatprep.subr.mxu0 0.0
    %394 = vmatpush1.xpose.msra.mxu0 0.0
    %395 = vmatprep.subr.mxu0 0.0
    %396 = vmatpush1.xpose.msra.mxu0 0.0
    %397 = vmatprep.subr.mxu0 0.0
    %398 = vmatpush1.xpose.msra.mxu0 0.0
    %399 = vmatprep.subr.mxu0 0.0
    %400 = vmatpush1.xpose.msra.mxu0 0.0
    %401 = vmatprep.subr.mxu0 0.0
    %402 = vmatpush1.xpose.msra.mxu0 %v371
    %403 = vmatprep.subr.mxu0 0.0
    %404 = vmatpush1.xpose.msra.mxu0 %v369
    %405 = vmatprep.subr.mxu0 0.0
    %406 = vmatpush2.xpose.msra.mxu0 0.0
    %407 = vmatprep.subr.mxu0 0.0
    %408 = vmatpush2.xpose.msra.mxu0 0.0
    %409 = vmatprep.subr.mxu0 0.0
    %410 = vmatpush2.xpose.msra.mxu0 0.0
    %411 = vmatprep.subr.mxu0 0.0
    %412 = vmatpush2.xpose.msra.mxu0 0.0
    %413 = vmatprep.subr.mxu0 0.0
    %414 = vmatpush2.xpose.msra.mxu0 0.0
    %415 = vmatprep.subr.mxu0 0.0
    %416 = vmatpush2.xpose.msra.mxu0 0.0
    %417 = vmatprep.subr.mxu0 0.0
    %418 = vmatpush2.xpose.msra.mxu0 0.0
    %419 = vmatprep.subr.mxu0 0.0
    %420 = vmatpush2.xpose.msra.mxu0 0.0
    %421 = vmatprep.subr.mxu0 0.0
    %422 = vmatpush2.xpose.msra.mxu0 0.0
    %423 = vmatprep.subr.mxu0 0.0
    %424 = vmatpush2.xpose.msra.mxu0 0.0
    %425 = vmatprep.subr.mxu0 0.0
    %426 = vmatpush2.xpose.msra.mxu0 0.0
    %427 = vmatprep.subr.mxu0 0.0
    %428 = vmatpush2.xpose.msra.mxu0 0.0
    %429 = vmatprep.subr.mxu0 0.0
    %430 = vmatpush2.xpose.msra.mxu0 0.0
    %431 = vmatprep.subr.mxu0 0.0
    %432 = vmatpush2.xpose.msra.mxu0 0.0
    %433 = vmatprep.subr.mxu0 0.0
    %434 = vmatpush2.xpose.msra.mxu0 0.0
    %435 = vmatprep.subr.mxu0 0.0
    %436 = vmatpush2.xpose.msra.mxu0 0.0
    %437 = vmatprep.mubr.f32.mxu0 0.0
    %438 = vmatmul.mubr.f32.gmra.mxu0 %v365
    %v439 = vpop.f32.mrf.mxu0
    %v440 = vadd.f32 0.0, %v439
    %v441 = vpop.f32.mrf.mxu0
    %442 = vmatprep.mubr.f32.mxu0 0.0
    %443 = vmatmul.mubr.f32.gmra.mxu0 %v367
    %v444 = vpop.f32.mrf.mxu0
    %v445 = vadd.f32 0.0, %v444
    %v446 = vpop.f32.mrf.mxu0
    %447 = vdwg.mxu0
    %v448 = vmul.f32 %v351, 0.25
    %v449 = vmul.f32 %v356, 0.25
    %v450 = vmul.f32 %v440, 0.25
    %v451 = vmul.f32 %v445, 0.25
    %v452 = vlaneseq
    %v453 = vshrl.u32 %v452, 7
    %v454 = vadd.s32 %v453, 8
    %vm455 = vcmp.ge.s32.totalorder %v453, %v35
    %vm456 = vcmp.ge.s32.totalorder %v454, %v35
    %v457 = vsel %vm455, 1, 0
    %v458 = vsel %vm456, 1, 0
    %vm459 = vcmp.eq.s32.totalorder %v457, 1
    %vm460 = vcmp.eq.s32.totalorder %v458, 1
    %v461 = vsel %vm459, %v448, -1e+30
    %v462 = vsel %vm460, %v449, -1e+30
    %v463 = vsel %vm459, %v450, -1e+30
    %v464 = vsel %vm460, %v451, -1e+30
    %v465 = vsel %vm172, %v461, -inf
    %466 = vmax.xlane.f32.xlu0 %v465
    %v467 = vpop.xlane.xlu0 %466
    %v468 = vsel %vm172, %v462, -inf
    %469 = vmax.xlane.f32.xlu0 %v468
    %v470 = vpop.xlane.xlu0 %469
    %v471 = vsel %vm172, %v463, -inf
    %472 = vmax.xlane.f32.xlu0 %v471
    %v473 = vpop.xlane.xlu0 %472
    %v474 = vsel %vm172, %v464, -inf
    %475 = vmax.xlane.f32.xlu0 %v474
    %v476 = vpop.xlane.xlu0 %475
    %v477 = vsub.f32 %v461, %v467
    %v478 = vsub.f32 %v462, %v470
    %v479 = vsub.f32 %v463, %v473
    %v480 = vsub.f32 %v464, %v476
    %v481 = vmul.f32 %v477, 1.442695
    %v482 = vpow.pop %v481
    %v483 = vmul.f32 %v478, 1.442695
    %v484 = vpow.pop %v483
    %v485 = vmul.f32 %v479, 1.442695
    %v486 = vpow.pop %v485
    %v487 = vmul.f32 %v480, 1.442695
    %v488 = vpow.pop %v487
    %v489 = vsel %vm172, %v482, 0.0
    %490 = vadd.xlane.f32.xlu0 %v489
    %v491 = vpop.xlane.xlu0 %490
    %v492 = vsel %vm172, %v484, 0.0
    %493 = vadd.xlane.f32.xlu0 %v492
    %v494 = vpop.xlane.xlu0 %493
    %v495 = vsel %vm172, %v486, 0.0
    %496 = vadd.xlane.f32.xlu0 %v495
    %v497 = vpop.xlane.xlu0 %496
    %v498 = vsel %vm172, %v488, 0.0
    %499 = vadd.xlane.f32.xlu0 %v498
    %v500 = vpop.xlane.xlu0 %499
    %v501 = vrcp.pop %v491
    %v502 = vmul.f32 %v482, %v501
    %v503 = vrcp.pop %v494
    %v504 = vmul.f32 %v484, %v503
    %v505 = vrcp.pop %v497
    %v506 = vmul.f32 %v486, %v505
    %v507 = vrcp.pop %v500
    %v508 = vmul.f32 %v488, %v507
    %509 = vrot.lane.b32.xlu0 %v252, 96
    %v510 = vpop.permute.xlu0 %509
    %511 = vrot.lane.b32.xlu0 %v257, 96
    %v512 = vpop.permute.xlu0 %511
    %v516 = vsel %vm172, %v502, 0
    %v519 = vsel %vm172, %v504, 0
    %521 = vmatprep.subr.mxu0 0.0
    %522 = vmatpush1.msra.mxu0 0.0
    %523 = vmatprep.subr.mxu0 0.0
    %524 = vmatpush1.msra.mxu0 0.0
    %525 = vmatprep.subr.mxu0 0.0
    %526 = vmatpush1.msra.mxu0 0.0
    %527 = vmatprep.subr.mxu0 0.0
    %528 = vmatpush1.msra.mxu0 0.0
    %529 = vmatprep.subr.mxu0 0.0
    %530 = vmatpush1.msra.mxu0 0.0
    %531 = vmatprep.subr.mxu0 0.0
    %532 = vmatpush1.msra.mxu0 0.0
    %533 = vmatprep.subr.mxu0 0.0
    %534 = vmatpush1.msra.mxu0 0.0
    %535 = vmatprep.subr.mxu0 0.0
    %536 = vmatpush1.msra.mxu0 0.0
    %537 = vmatprep.subr.mxu0 0.0
    %538 = vmatpush1.msra.mxu0 0.0
    %539 = vmatprep.subr.mxu0 0.0
    %540 = vmatpush1.msra.mxu0 0.0
    %541 = vmatprep.subr.mxu0 0.0
    %542 = vmatpush1.msra.mxu0 0.0
    %543 = vmatprep.subr.mxu0 0.0
    %544 = vmatpush1.msra.mxu0 0.0
    %545 = vmatprep.subr.mxu0 0.0
    %546 = vmatpush1.msra.mxu0 0.0
    %547 = vmatprep.subr.mxu0 0.0
    %548 = vmatpush1.msra.mxu0 0.0
    %549 = vmatprep.subr.mxu0 0.0
    %550 = vmatpush1.msra.mxu0 %v512
    %551 = vmatprep.subr.mxu0 0.0
    %552 = vmatpush1.msra.mxu0 %v510
    %553 = vmatprep.subr.mxu0 0.0
    %554 = vmatpush2.msra.mxu0 0.0
    %555 = vmatprep.subr.mxu0 0.0
    %556 = vmatpush2.msra.mxu0 0.0
    %557 = vmatprep.subr.mxu0 0.0
    %558 = vmatpush2.msra.mxu0 0.0
    %559 = vmatprep.subr.mxu0 0.0
    %560 = vmatpush2.msra.mxu0 0.0
    %561 = vmatprep.subr.mxu0 0.0
    %562 = vmatpush2.msra.mxu0 0.0
    %563 = vmatprep.subr.mxu0 0.0
    %564 = vmatpush2.msra.mxu0 0.0
    %565 = vmatprep.subr.mxu0 0.0
    %566 = vmatpush2.msra.mxu0 0.0
    %567 = vmatprep.subr.mxu0 0.0
    %568 = vmatpush2.msra.mxu0 0.0
    %569 = vmatprep.subr.mxu0 0.0
    %570 = vmatpush2.msra.mxu0 0.0
    %571 = vmatprep.subr.mxu0 0.0
    %572 = vmatpush2.msra.mxu0 0.0
    %573 = vmatprep.subr.mxu0 0.0
    %574 = vmatpush2.msra.mxu0 0.0
    %575 = vmatprep.subr.mxu0 0.0
    %576 = vmatpush2.msra.mxu0 0.0
    %577 = vmatprep.subr.mxu0 0.0
    %578 = vmatpush2.msra.mxu0 0.0
    %579 = vmatprep.subr.mxu0 0.0
    %580 = vmatpush2.msra.mxu0 0.0
    %581 = vmatprep.subr.mxu0 0.0
    %582 = vmatpush2.msra.mxu0 0.0
    %583 = vmatprep.subr.mxu0 0.0
    %584 = vmatpush2.msra.mxu0 0.0
    %585 = vmatprep.mubr.f32.mxu0 0.0
    %586 = vmatmul.mubr.f32.gmra.mxu0 %v516
    %v587 = vpop.f32.mrf.mxu0
    %v588 = vadd.f32 0.0, %v587
    %v589 = vpop.f32.mrf.mxu0
    %590 = vmatprep.mubr.f32.mxu0 0.0
    %591 = vmatmul.mubr.f32.gmra.mxu0 %v519
    %v592 = vpop.f32.mrf.mxu0
    %v593 = vadd.f32 0.0, %v592
    %v594 = vpop.f32.mrf.mxu0
    %595 = vdwg.mxu0
    %596 = vrot.lane.b32.xlu0 %v262, 96
    %v597 = vpop.permute.xlu0 %596
    %598 = vrot.lane.b32.xlu0 %v267, 96
    %v599 = vpop.permute.xlu0 %598
    %v603 = vsel %vm172, %v506, 0
    %v606 = vsel %vm172, %v508, 0
    %608 = vmatprep.subr.mxu0 0.0
    %609 = vmatpush1.msra.mxu0 0.0
    %610 = vmatprep.subr.mxu0 0.0
    %611 = vmatpush1.msra.mxu0 0.0
    %612 = vmatprep.subr.mxu0 0.0
    %613 = vmatpush1.msra.mxu0 0.0
    %614 = vmatprep.subr.mxu0 0.0
    %615 = vmatpush1.msra.mxu0 0.0
    %616 = vmatprep.subr.mxu0 0.0
    %617 = vmatpush1.msra.mxu0 0.0
    %618 = vmatprep.subr.mxu0 0.0
    %619 = vmatpush1.msra.mxu0 0.0
    %620 = vmatprep.subr.mxu0 0.0
    %621 = vmatpush1.msra.mxu0 0.0
    %622 = vmatprep.subr.mxu0 0.0
    %623 = vmatpush1.msra.mxu0 0.0
    %624 = vmatprep.subr.mxu0 0.0
    %625 = vmatpush1.msra.mxu0 0.0
    %626 = vmatprep.subr.mxu0 0.0
    %627 = vmatpush1.msra.mxu0 0.0
    %628 = vmatprep.subr.mxu0 0.0
    %629 = vmatpush1.msra.mxu0 0.0
    %630 = vmatprep.subr.mxu0 0.0
    %631 = vmatpush1.msra.mxu0 0.0
    %632 = vmatprep.subr.mxu0 0.0
    %633 = vmatpush1.msra.mxu0 0.0
    %634 = vmatprep.subr.mxu0 0.0
    %635 = vmatpush1.msra.mxu0 0.0
    %636 = vmatprep.subr.mxu0 0.0
    %637 = vmatpush1.msra.mxu0 %v599
    %638 = vmatprep.subr.mxu0 0.0
    %639 = vmatpush1.msra.mxu0 %v597
    %640 = vmatprep.subr.mxu0 0.0
    %641 = vmatpush2.msra.mxu0 0.0
    %642 = vmatprep.subr.mxu0 0.0
    %643 = vmatpush2.msra.mxu0 0.0
    %644 = vmatprep.subr.mxu0 0.0
    %645 = vmatpush2.msra.mxu0 0.0
    %646 = vmatprep.subr.mxu0 0.0
    %647 = vmatpush2.msra.mxu0 0.0
    %648 = vmatprep.subr.mxu0 0.0
    %649 = vmatpush2.msra.mxu0 0.0
    %650 = vmatprep.subr.mxu0 0.0
    %651 = vmatpush2.msra.mxu0 0.0
    %652 = vmatprep.subr.mxu0 0.0
    %653 = vmatpush2.msra.mxu0 0.0
    %654 = vmatprep.subr.mxu0 0.0
    %655 = vmatpush2.msra.mxu0 0.0
    %656 = vmatprep.subr.mxu0 0.0
    %657 = vmatpush2.msra.mxu0 0.0
    %658 = vmatprep.subr.mxu0 0.0
    %659 = vmatpush2.msra.mxu0 0.0
    %660 = vmatprep.subr.mxu0 0.0
    %661 = vmatpush2.msra.mxu0 0.0
    %662 = vmatprep.subr.mxu0 0.0
    %663 = vmatpush2.msra.mxu0 0.0
    %664 = vmatprep.subr.mxu0 0.0
    %665 = vmatpush2.msra.mxu0 0.0
    %666 = vmatprep.subr.mxu0 0.0
    %667 = vmatpush2.msra.mxu0 0.0
    %668 = vmatprep.subr.mxu0 0.0
    %669 = vmatpush2.msra.mxu0 0.0
    %670 = vmatprep.subr.mxu0 0.0
    %671 = vmatpush2.msra.mxu0 0.0
    %672 = vmatprep.mubr.f32.mxu0 0.0
    %673 = vmatmul.mubr.f32.gmra.mxu0 %v603
    %v674 = vpop.f32.mrf.mxu0
    %v675 = vadd.f32 0.0, %v674
    %v676 = vpop.f32.mrf.mxu0
    %677 = vmatprep.mubr.f32.mxu0 0.0
    %678 = vmatmul.mubr.f32.gmra.mxu0 %v606
    %v679 = vpop.f32.mrf.mxu0
    %v680 = vadd.f32 0.0, %v679
    %v681 = vpop.f32.mrf.mxu0
    %682 = vdwg.mxu0
    %v683 = vsel %vm172, %v588, 0.0
    %684 = vadd.xlane.f32.xlu0 %v683
    %v685 = vpop.xlane.xlu0 %684
    %v686 = vsel %vm172, %v593, 0.0
    %687 = vadd.xlane.f32.xlu0 %v686
    %v688 = vpop.xlane.xlu0 %687
    %v689 = vsel %vm172, %v675, 0.0
    %690 = vadd.xlane.f32.xlu0 %v689
    %v691 = vpop.xlane.xlu0 %690
    %v692 = vsel %vm172, %v680, 0.0
    %693 = vadd.xlane.f32.xlu0 %v692
    %v694 = vpop.xlane.xlu0 %693
    %v695 = vrcp.pop 16.0
    %v696 = vmul.f32 %v685, %v695
    %v697 = vmul.f32 %v688, %v695
    %v698 = vmul.f32 %v691, %v695
    %v699 = vmul.f32 %v694, %v695
    %v700 = vsub.f32 %v588, %v696
    %v701 = vsub.f32 %v593, %v697
    %v702 = vsub.f32 %v675, %v698
    %v703 = vsub.f32 %v680, %v699
    %v704 = vmul.f32 %v700, %v700
    %v705 = vmul.f32 %v701, %v701
    %v706 = vmul.f32 %v702, %v702
    %v707 = vmul.f32 %v703, %v703
    %v708 = vsel %vm172, %v704, 0.0
    %709 = vadd.xlane.f32.xlu0 %v708
    %v710 = vpop.xlane.xlu0 %709
    %v711 = vsel %vm172, %v705, 0.0
    %712 = vadd.xlane.f32.xlu0 %v711
    %v713 = vpop.xlane.xlu0 %712
    %v714 = vsel %vm172, %v706, 0.0
    %715 = vadd.xlane.f32.xlu0 %v714
    %v716 = vpop.xlane.xlu0 %715
    %v717 = vsel %vm172, %v707, 0.0
    %718 = vadd.xlane.f32.xlu0 %v717
    %v719 = vpop.xlane.xlu0 %718
    %v720 = vmul.f32 %v710, %v695
    %v721 = vmul.f32 %v713, %v695
    %v722 = vmul.f32 %v716, %v695
    %v723 = vmul.f32 %v719, %v695
    %v724 = vadd.f32 %v720, 1e-05
    %v725 = vadd.f32 %v721, 1e-05
    %v726 = vadd.f32 %v722, 1e-05
    %v727 = vadd.f32 %v723, 1e-05
    %v728 = vrsqrt.pop %v724
    %v729 = vrsqrt.pop %v725
    %v730 = vrsqrt.pop %v726
    %v731 = vrsqrt.pop %v727
    %v732 = vmul.f32 %v700, %v728
    %v733 = vmul.f32 %v701, %v729
    %v734 = vmul.f32 %v702, %v730
    %v735 = vmul.f32 %v703, %v731
    %v736 = vld [vmem:[%s4] sm:$0x1]
    %v738 = vlaneseq
    %v739 = vshrl.u32 %v738, 7
    %v740 = vsub.s32 0, %v739
    %v741 = vrot.slane %v736, %v740
    %v743 = vmul.f32 %v732, %v741
    %v744 = vmul.f32 %v733, %v741
    %v745 = vmul.f32 %v734, %v741
    %v746 = vmul.f32 %v735, %v741
    %v747 = vld [vmem:[%s5] sm:$0x1]
    %v749 = vlaneseq
    %v750 = vshrl.u32 %v749, 7
    %v751 = vsub.s32 0, %v750
    %v752 = vrot.slane %v747, %v751
    %v754 = vadd.f32 %v743, %v752
    %v755 = vadd.f32 %v744, %v752
    %v756 = vadd.f32 %v745, %v752
    %v757 = vadd.f32 %v746, %v752
    %v758 = vld [vmem:[%s6] sm:$0xff]
    %v759 = vld [vmem:[%s6 + $0x8] sm:$0xff]
    %v760 = vld [vmem:[%s7] sm:$0x1]
    %v762 = vlaneseq
    %v763 = vshrl.u32 %v762, 7
    %v764 = vsub.s32 0, %v763
    %v765 = vrot.slane %v760, %v764
    %v768 = vsel %vm172, %v754, 0
    %v771 = vsel %vm172, %v755, 0
    %v774 = vsel %vm172, %v756, 0
    %v777 = vsel %vm172, %v757, 0
    %779 = vmatprep.subr.mxu0 0.0
    %780 = vmatpush1.msra.mxu0 0.0
    %781 = vmatprep.subr.mxu0 0.0
    %782 = vmatpush1.msra.mxu0 0.0
    %783 = vmatprep.subr.mxu0 0.0
    %784 = vmatpush1.msra.mxu0 0.0
    %785 = vmatprep.subr.mxu0 0.0
    %786 = vmatpush1.msra.mxu0 0.0
    %787 = vmatprep.subr.mxu0 0.0
    %788 = vmatpush1.msra.mxu0 0.0
    %789 = vmatprep.subr.mxu0 0.0
    %790 = vmatpush1.msra.mxu0 0.0
    %791 = vmatprep.subr.mxu0 0.0
    %792 = vmatpush1.msra.mxu0 0.0
    %793 = vmatprep.subr.mxu0 0.0
    %794 = vmatpush1.msra.mxu0 0.0
    %795 = vmatprep.subr.mxu0 0.0
    %796 = vmatpush1.msra.mxu0 0.0
    %797 = vmatprep.subr.mxu0 0.0
    %798 = vmatpush1.msra.mxu0 0.0
    %799 = vmatprep.subr.mxu0 0.0
    %800 = vmatpush1.msra.mxu0 0.0
    %801 = vmatprep.subr.mxu0 0.0
    %802 = vmatpush1.msra.mxu0 0.0
    %803 = vmatprep.subr.mxu0 0.0
    %804 = vmatpush1.msra.mxu0 0.0
    %805 = vmatprep.subr.mxu0 0.0
    %806 = vmatpush1.msra.mxu0 0.0
    %807 = vmatprep.subr.mxu0 0.0
    %808 = vmatpush1.msra.mxu0 %v759
    %809 = vmatprep.subr.mxu0 0.0
    %810 = vmatpush1.msra.mxu0 %v758
    %811 = vmatprep.subr.mxu0 0.0
    %812 = vmatpush2.msra.mxu0 0.0
    %813 = vmatprep.subr.mxu0 0.0
    %814 = vmatpush2.msra.mxu0 0.0
    %815 = vmatprep.subr.mxu0 0.0
    %816 = vmatpush2.msra.mxu0 0.0
    %817 = vmatprep.subr.mxu0 0.0
    %818 = vmatpush2.msra.mxu0 0.0
    %819 = vmatprep.subr.mxu0 0.0
    %820 = vmatpush2.msra.mxu0 0.0
    %821 = vmatprep.subr.mxu0 0.0
    %822 = vmatpush2.msra.mxu0 0.0
    %823 = vmatprep.subr.mxu0 0.0
    %824 = vmatpush2.msra.mxu0 0.0
    %825 = vmatprep.subr.mxu0 0.0
    %826 = vmatpush2.msra.mxu0 0.0
    %827 = vmatprep.subr.mxu0 0.0
    %828 = vmatpush2.msra.mxu0 0.0
    %829 = vmatprep.subr.mxu0 0.0
    %830 = vmatpush2.msra.mxu0 0.0
    %831 = vmatprep.subr.mxu0 0.0
    %832 = vmatpush2.msra.mxu0 0.0
    %833 = vmatprep.subr.mxu0 0.0
    %834 = vmatpush2.msra.mxu0 0.0
    %835 = vmatprep.subr.mxu0 0.0
    %836 = vmatpush2.msra.mxu0 0.0
    %837 = vmatprep.subr.mxu0 0.0
    %838 = vmatpush2.msra.mxu0 0.0
    %839 = vmatprep.subr.mxu0 0.0
    %840 = vmatpush2.msra.mxu0 0.0
    %841 = vmatprep.subr.mxu0 0.0
    %842 = vmatpush2.msra.mxu0 0.0
    %843 = vmatprep.mubr.f32.mxu0 0.0
    %844 = vmatmul.mubr.f32.gmra.mxu0 %v768
    %v845 = vpop.f32.mrf.mxu0
    %v846 = vadd.f32 %v765, %v845
    %v847 = vpop.f32.mrf.mxu0
    %848 = vmatprep.mubr.f32.mxu0 0.0
    %849 = vmatmul.mubr.f32.gmra.mxu0 %v771
    %v850 = vpop.f32.mrf.mxu0
    %v851 = vadd.f32 %v765, %v850
    %v852 = vpop.f32.mrf.mxu0
    %853 = vmatprep.mubr.f32.mxu0 0.0
    %854 = vmatmul.mubr.f32.gmra.mxu0 %v774
    %v855 = vpop.f32.mrf.mxu0
    %v856 = vadd.f32 %v765, %v855
    %v857 = vpop.f32.mrf.mxu0
    %858 = vmatprep.mubr.f32.mxu0 0.0
    %859 = vmatmul.mubr.f32.gmra.mxu0 %v777
    %v860 = vpop.f32.mrf.mxu0
    %v861 = vadd.f32 %v765, %v860
    %v862 = vpop.f32.mrf.mxu0
    %863 = vdwg.mxu0
    %864 = vst [vmem:[#allocation2] sm:$0xff] %v846
    %865 = vst [vmem:[#allocation2 + $0x8] sm:$0xff] %v851
    %866 = vst [vmem:[#allocation2 + $0x10] sm:$0xff] %v856
    %867 = vst [vmem:[#allocation2 + $0x18] sm:$0xff] %v861
    // Predicated region
    $region34: #{tpu_custom_call.1} parent=1 // pred_check
      _
    $region35: #{tpu_custom_call.1} parent=1 // pred_check_branch
      %869 = sbr.rel (0) target = $region37
    $region36: #{tpu_custom_call.1} parent=1 // pred_region
      %s871 = ssub.s32 512, 512
      %872 = vsyncadd [#allocation3], %s871
      %s873 = sshll.u32 [#allocation2], 4
      %s874 = int_to_ptr.vmem [resolvable:$true] %s873
      %879 = dma.vmem_to_hbm [thread:$0]  %s874, 512, %s8, [#allocation3], 128, 128, 8
    $region37: #{tpu_custom_call.1} parent=1 // pred_fallthru
      _
    // Predicated region
    $region38: #{tpu_custom_call.1} parent=1 // pred_check
      _
    $region39: #{tpu_custom_call.1} parent=1 // pred_check_branch
      %881 = sbr.rel (0) target = $region41
    $region40: #{tpu_custom_call.1} parent=1 // pred_region
      %882 = dma.done [#allocation3], 512
    $region41: #{tpu_custom_call.1} parent=1 // pred_fallthru
      _
    %883 = vsyncpa [#allocation3], 1

</llo_original>
